<compile_context>
chip_gen: v5e
topology: v5e:2x2
jax: 0.10.0
libtpu: 0.0.40
codegen_flags: <defaults>
</compile_context>

<pallas_src>
import jax
import jax.numpy as jnp
from jax.experimental import pallas as pl
from jax.experimental.pallas import tpu as pltpu

_NEG_BIG = -1e30  # bias value for padded class columns (kills them in softmax)


def _round_up(x, m):
    return ((x + m - 1) // m) * m


def _class_head_kernel(alpha_ref, x_ref, w_ref, b_ref, scores_ref):
    """PReLU -> Linear(bf16 MXU, f32 acc) -> log_softmax, one row-tile per step.

    alpha_ref:  SMEM (1,)        f32   PReLU slope for negative inputs
    x_ref:      VMEM (TB, E)     f32   raw embedding rows (both branches stacked)
    w_ref:      VMEM (E, Cpad)   bf16  fc1 weight, pre-transposed + zero-padded
    b_ref:      VMEM (1, Cpad)   f32   fc1 bias, padded cols = -1e30
    scores_ref: VMEM (TB, Cpad)  f32   log-softmax scores (lane-dense slab)
    """
    alpha = alpha_ref[0]
    x = x_ref[...]

    # PReLU (single shared parameter, nn.PReLU() default) -- f32 on the VPU.
    y = jnp.where(x > 0, x, alpha * x)

    # Linear: bf16 operands on the MXU, f32 accumulation, f32 bias add.
    logits = jnp.dot(y.astype(w_ref.dtype), w_ref[...],
                     preferred_element_type=jnp.float32) + b_ref[...]

    # Numerically-stable log_softmax over the (padded) class dim, f32.
    m = jnp.max(logits, axis=-1, keepdims=True)
    shifted = logits - m
    lse = jnp.log(jnp.sum(jnp.exp(shifted), axis=-1, keepdims=True))
    scores_ref[...] = (shifted - lse).astype(scores_ref.dtype)


def _class_head(stacked, alpha, w_t_bf16, b_row_pad, tb):
    """One fused launch over all stacked rows; grid over row tiles of size tb."""
    rows, embd = stacked.shape
    c_pad = w_t_bf16.shape[1]
    grid = (rows // tb,)
    return pl.pallas_call(
        _class_head_kernel,
        out_shape=jax.ShapeDtypeStruct((rows, c_pad), jnp.float32),
        grid=grid,
        in_specs=[
            pl.BlockSpec(memory_space=pltpu.MemorySpace.SMEM),   # alpha (scalar)
            pl.BlockSpec((tb, embd), lambda i: (i, 0)),          # x row tile
            pl.BlockSpec((embd, c_pad), lambda i: (0, 0)),       # weights (resident)
            pl.BlockSpec((1, c_pad), lambda i: (0, 0)),          # bias (resident)
        ],
        out_specs=pl.BlockSpec((tb, c_pad), lambda i: (i, 0)),
        compiler_params=pltpu.CompilerParams(
            dimension_semantics=("parallel",)),
    )(alpha, stacked, w_t_bf16, b_row_pad)


class SiameseNetClassNetPallas:
    """JAX/Pallas equivalent of SiameseNet_ClassNet (outraw-provided path)."""

    def __init__(self, n_classes, embd_size, key):
        k_w, k_b = jax.random.split(key)
        # Deterministic init mimicking nn.Linear default (uniform +/- 1/sqrt(fan_in)).
        bound = 1.0 / (embd_size ** 0.5)
        w = jax.random.uniform(k_w, (n_classes, embd_size), jnp.float32,
                               minval=-bound, maxval=bound)
        b = jax.random.uniform(k_b, (n_classes,), jnp.float32,
                               minval=-bound, maxval=bound)

        self.n_classes = n_classes
        self.embd_size = embd_size
        self.c_pad = _round_up(n_classes, 128)  # lane-dense output width

        # Weight stored transposed (E, Cpad), zero-padded cols, bf16 for the MXU.
        w_t = jnp.zeros((embd_size, self.c_pad), jnp.float32)
        w_t = w_t.at[:, :n_classes].set(w.T)
        self.w_t_bf16 = w_t.astype(jnp.bfloat16)

        # Bias (1, Cpad): padded class columns get -1e30 so softmax ignores them.
        b_pad = jnp.full((1, self.c_pad), _NEG_BIG, jnp.float32)
        self.b_row_pad = b_pad.at[0, :n_classes].set(b)

        self.alpha = jnp.array([0.25], dtype=jnp.float32)  # nn.PReLU() default

    def __call__(self, x1, x2, outraw1, outraw2):
        # x1 / x2 only matter when outraw is None (embedding_net path), which
        # is not supported here.
        assert outraw1 is not None and outraw2 is not None
        batch = outraw1.shape[0]

        # Fuse both siamese branches into one kernel launch.
        stacked = jnp.concatenate([outraw1, outraw2], axis=0)  # (2B, E)
        rows = 2 * batch
        tb = 256 if rows >= 256 else _round_up(rows, 8)
        rows_pad = _round_up(rows, tb)
        if rows_pad != rows:
            stacked = jnp.pad(stacked, ((0, rows_pad - rows), (0, 0)))

        scores_pad = _class_head(stacked, self.alpha, self.w_t_bf16,
                                 self.b_row_pad, tb)
        scores = scores_pad[:rows, :self.n_classes]
        scores1, scores2 = scores[:batch], scores[batch:]
        return outraw1, outraw2, scores1, scores2


def _reference(outraw, alpha, w_t_bf16, b_row_pad, n_classes):
    """Pure-JAX reference mirroring the kernel's bf16-matmul / f32-acc numerics."""
    y = jnp.where(outraw > 0, outraw, alpha[0] * outraw)
    logits = jnp.dot(y.astype(jnp.bfloat16), w_t_bf16,
                     preferred_element_type=jnp.float32) + b_row_pad
    return jax.nn.log_softmax(logits, axis=-1)[:, :n_classes]


if __name__ == "__main__":
    key = jax.random.PRNGKey(0)
    k_net, k_x1, k_x2, k_e1, k_e2 = jax.random.split(key, 5)

    batch, chans, spatial = 2, 4, 16
    embd_size, n_classes = 32, 8

    # Dummy image inputs (unused by the outraw-provided forward path).
    x1 = jax.random.normal(k_x1, (batch, chans, spatial, spatial), jnp.float32)
    x2 = jax.random.normal(k_x2, (batch, chans, spatial, spatial), jnp.float32)

    # Precomputed embeddings (outraw1 / outraw2).
    outraw1 = jax.random.normal(k_e1, (batch, embd_size), jnp.float32)
    outraw2 = jax.random.normal(k_e2, (batch, embd_size), jnp.float32)

    net = SiameseNetClassNetPallas(n_classes, embd_size, k_net)

    o1, o2, s1, s2 = net(x1, x2, outraw1, outraw2)
    jax.block_until_ready((o1, o2, s1, s2))

    # Correctness check against a pure-JAX reference (same bf16 operand cast).
    r1 = _reference(outraw1, net.alpha, net.w_t_bf16, net.b_row_pad, n_classes)
    r2 = _reference(outraw2, net.alpha, net.w_t_bf16, net.b_row_pad, n_classes)
    assert jnp.allclose(s1, r1, atol=2e-3, rtol=2e-3), "scores1 mismatch"
    assert jnp.allclose(s2, r2, atol=2e-3, rtol=2e-3), "scores2 mismatch"
    assert jnp.array_equal(o1, outraw1) and jnp.array_equal(o2, outraw2)

    print("KERNEL_OK")
</pallas_src>

<mosaic_0001>
module attributes {stable_mosaic.version = 11 : i64} {
  func.func @_class_head_kernel(%arg0: i32, %arg1: memref<1xf32, #tpu.memory_space<smem>>, %arg2: memref<8x32xf32, #tpu.memory_space<vmem>>, %arg3: memref<32x128xbf16, #tpu.memory_space<vmem>>, %arg4: memref<1x128xf32, #tpu.memory_space<vmem>>, %arg5: memref<8x128xf32, #tpu.memory_space<vmem>>) attributes {dimension_semantics = [#tpu.dimension_semantics<parallel>], iteration_bounds = array<i64: 1>, scalar_prefetch = 0 : i64, scratch_operands = 0 : i64, tpu.core_type = #tpu.core_type<tc>, window_params = [{transform_indices = @transform_0, window_bounds = array<i64: 1>}, {transform_indices = @transform_1, window_bounds = array<i64: 8, 32>}, {pipeline_mode = #tpu.pipeline_mode<synchronous>, transform_indices = @transform_2, window_bounds = array<i64: 32, 128>}, {pipeline_mode = #tpu.pipeline_mode<synchronous>, transform_indices = @transform_3, window_bounds = array<i64: 1, 128>}, {transform_indices = @transform_4, window_bounds = array<i64: 8, 128>}]} {
    %c0 = arith.constant 0 : index
    %0 = memref.load %arg1[%c0] : memref<1xf32, #tpu.memory_space<smem>>
    %c0_0 = arith.constant 0 : index
    %c0_1 = arith.constant 0 : index
    %1 = vector.load %arg2[%c0_0, %c0_1] : memref<8x32xf32, #tpu.memory_space<vmem>>, vector<8x32xf32>
    %cst = arith.constant 0.000000e+00 : f32
    %2 = vector.broadcast %cst : f32 to vector<8x32xf32>
    %3 = arith.cmpf ogt, %1, %2 : vector<8x32xf32>
    %4 = vector.broadcast %0 : f32 to vector<8x32xf32>
    %5 = arith.mulf %4, %1 : vector<8x32xf32>
    %6 = arith.select %3, %1, %5 : vector<8x32xi1>, vector<8x32xf32>
    %7 = arith.truncf %6 : vector<8x32xf32> to vector<8x32xbf16>
    %c0_2 = arith.constant 0 : index
    %c0_3 = arith.constant 0 : index
    %8 = vector.load %arg3[%c0_2, %c0_3] : memref<32x128xbf16, #tpu.memory_space<vmem>>, vector<32x128xbf16>
    %cst_4 = arith.constant dense<0.000000e+00> : vector<8x128xf32>
    %9 = tpu.matmul %7, %8, %cst_4 {dimension_numbers = #tpu.dot_dimension_numbers<[1], [0], [0], [1], [0, 0, 1, 1], [], []>} : vector<8x32xbf16>, vector<32x128xbf16>, vector<8x128xf32> -> vector<8x128xf32>
    %c0_5 = arith.constant 0 : index
    %c0_6 = arith.constant 0 : index
    %10 = vector.load %arg4[%c0_5, %c0_6] : memref<1x128xf32, #tpu.memory_space<vmem>>, vector<1x128xf32>
    %11 = vector.broadcast %10 : vector<1x128xf32> to vector<8x128xf32>
    %12 = arith.addf %9, %11 : vector<8x128xf32>
    %cst_7 = arith.constant dense<0xFF800000> : vector<8xf32>
    %13 = vector.multi_reduction <maximumf>, %12, %cst_7 [1] : vector<8x128xf32> to vector<8xf32>
    %14 = vector.shape_cast %13 : vector<8xf32> to vector<8x1xf32>
    %15 = vector.broadcast %14 : vector<8x1xf32> to vector<8x128xf32>
    %16 = arith.subf %12, %15 : vector<8x128xf32>
    %17 = math.exp %16 : vector<8x128xf32>
    %cst_8 = arith.constant dense<0.000000e+00> : vector<8xf32>
    %18 = vector.multi_reduction <add>, %17, %cst_8 [1] : vector<8x128xf32> to vector<8xf32>
    %19 = vector.shape_cast %18 : vector<8xf32> to vector<8x1xf32>
    %20 = math.log %19 : vector<8x1xf32>
    %21 = vector.broadcast %20 : vector<8x1xf32> to vector<8x128xf32>
    %22 = arith.subf %16, %21 : vector<8x128xf32>
    %c0_9 = arith.constant 0 : index
    %c0_10 = arith.constant 0 : index
    %23 = vector.load %arg5[%c0_9, %c0_10] : memref<8x128xf32, #tpu.memory_space<vmem>>, vector<8x128xf32>
    tpu.vector_store %arg5[%c0_9, %c0_10], %22 {strides = array<i32>} : memref<8x128xf32, #tpu.memory_space<vmem>>, vector<8x128xf32>,
    return
  }
  func.func @transform_0(%arg0: i32) -> i32 {
    %c0_i32 = arith.constant 0 : i32
    %c0_i32_0 = arith.constant 0 : i32
    return %c0_i32 : i32
  }
  func.func @transform_1(%arg0: i32) -> (i32, i32) {
    %c0_i32 = arith.constant 0 : i32
    %c0_i32_0 = arith.constant 0 : i32
    return %arg0, %c0_i32 : i32, i32
  }
  func.func @transform_2(%arg0: i32) -> (i32, i32) {
    %c0_i32 = arith.constant 0 : i32
    %c0_i32_0 = arith.constant 0 : i32
    %c0_i32_1 = arith.constant 0 : i32
    return %c0_i32, %c0_i32_0 : i32, i32
  }
  func.func @transform_3(%arg0: i32) -> (i32, i32) {
    %c0_i32 = arith.constant 0 : i32
    %c0_i32_0 = arith.constant 0 : i32
    %c0_i32_1 = arith.constant 0 : i32
    return %c0_i32, %c0_i32_0 : i32, i32
  }
  func.func @transform_4(%arg0: i32) -> (i32, i32) {
    %c0_i32 = arith.constant 0 : i32
    %c0_i32_0 = arith.constant 0 : i32
    return %arg0, %c0_i32 : i32, i32
  }
}

</mosaic_0001>

<llo_original>
// kernel: tpu_custom_call.1
$region0: #{tpu_custom_call.1}
  #allocation0 [shape = 'u32[]', space=smem, size = 0x4, offset = 0x4, fixed_abs, tag = 'smem constant byte address 0x4 - core index']
  #allocation1 [shape = 'u32[72,128]{1,0:T(1,128)}', space=vmem, size = 0x9000, scoped, tag = 'internal scratch']
  #allocation2 [shape = 'f32[1]{0:T(128)S(6)}', space=smem, size = 0x200, scoped, tag = 'scoped memory for tpu_custom_call.1']
  %s0 = inlined_call_operand.<no memory space> [shape: f32[1], index: 0, kind: input, shape index: {}]
  %s1 = inlined_call_operand.hbm [shape: f32[8,32], index: 1, kind: input, shape index: {}]
  %s2 = inlined_call_operand.hbm [shape: bf16[32,128], index: 2, kind: input, shape index: {}]
  %s3 = inlined_call_operand.vmem [shape: f32[1,128], index: 3, kind: input, shape index: {}]
  %s4 = inlined_call_operand.hbm [shape: f32[8,128], index: 4, kind: output, shape index: {}]
  %s5 = sld [smem:[#allocation0]]
  $region34: #{tpu_custom_call.1} parent=0
    _
  %s7 = ssub.s32 1, %s5
  %s8 = scalar_select 0, %s7, %s5
  %9 = sst [smem:[#allocation2]] %s0
  $region1: #{tpu_custom_call.1} parent=0
    #allocation3 [shape = 'u8[4096]{0}', space=vmem, size = 0x1000, scoped, tag = 'input window, operand 1, single buffered']
    #allocation4 [shape = 's32[1]{0}', space=sflag, size = 0x4, scoped, tag = 'scoped memory for tpu_custom_call.1']
    #allocation5 [shape = 's32[1]{0}', space=sflag, size = 0x4, scoped, tag = 'scoped memory for tpu_custom_call.1']
    #allocation6 [shape = 'u8[8192]{0}', space=vmem, size = 0x2000, scoped, tag = 'input window, operand 2, single buffered']
    #allocation7 [shape = 's32[1]{0}', space=sflag, size = 0x4, scoped, tag = 'scoped memory for tpu_custom_call.1']
    #allocation8 [shape = 'u8[4096]{0}', space=vmem, size = 0x1000, scoped, tag = 'output window, operand 0, single buffered']
    %10 = vsyncpa [#allocation4], 0
    %11 = vsyncpa [#allocation7], 0
    %12 = vsyncpa [#allocation5], 0
    // Predicated region
    $region2: #{tpu_custom_call.1} parent=1 // pred_check
      _
    $region3: #{tpu_custom_call.1} parent=1 // pred_check_branch
      %14 = sbr.rel (0) target = $region5
    $region4: #{tpu_custom_call.1} parent=1 // pred_region
      _
    $region5: #{tpu_custom_call.1} parent=1 // pred_fallthru
      _
    // Predicated region
    $region6: #{tpu_custom_call.1} parent=1 // pred_check
      _
    $region7: #{tpu_custom_call.1} parent=1 // pred_check_branch
      %16 = sbr.rel (0) target = $region9
    $region8: #{tpu_custom_call.1} parent=1 // pred_region
      %18 = vsyncadd [#allocation4], 0
      %s20 = sshll.u32 %s1, 4
      %s21 = int_to_ptr.hbm [resolvable:$true] %s20
      %s22 = sshll.u32 [#allocation3], 4
      %s23 = int_to_ptr.vmem [resolvable:$true] %s22
      %25 = dma.hbm_to_vmem [thread:$0]  %s21, 128, %s23, [#allocation4]
    $region9: #{tpu_custom_call.1} parent=1 // pred_fallthru
      _
    // Predicated region
    $region10: #{tpu_custom_call.1} parent=1 // pred_check
      _
    $region11: #{tpu_custom_call.1} parent=1 // pred_check_branch
      %27 = sbr.rel (0) target = $region13
    $region12: #{tpu_custom_call.1} parent=1 // pred_region
      %29 = vsyncadd [#allocation7], 0
      %s30 = sshll.u32 %s2, 4
      %s31 = int_to_ptr.hbm [resolvable:$true] %s30
      %s32 = sshll.u32 [#allocation6], 4
      %s33 = int_to_ptr.vmem [resolvable:$true] %s32
      %38 = dma.hbm_to_vmem [thread:$0]  %s31, 256, %s33, [#allocation7], 64, 64, 4
    $region13: #{tpu_custom_call.1} parent=1 // pred_fallthru
      _
    // Predicated region
    $region14: #{tpu_custom_call.1} parent=1 // pred_check
      _
    $region15: #{tpu_custom_call.1} parent=1 // pred_check_branch
      %40 = sbr.rel (0) target = $region17
    $region16: #{tpu_custom_call.1} parent=1 // pred_region
      _
    $region17: #{tpu_custom_call.1} parent=1 // pred_fallthru
      _
    // Predicated region
    $region18: #{tpu_custom_call.1} parent=1 // pred_check
      _
    $region19: #{tpu_custom_call.1} parent=1 // pred_check_branch
      %42 = sbr.rel (0) target = $region21
    $region20: #{tpu_custom_call.1} parent=1 // pred_region
      %44 = dma.done [#allocation4], 128
    $region21: #{tpu_custom_call.1} parent=1 // pred_fallthru
      _
    // Predicated region
    $region22: #{tpu_custom_call.1} parent=1 // pred_check
      _
    $region23: #{tpu_custom_call.1} parent=1 // pred_check_branch
      %46 = sbr.rel (0) target = $region25
    $region24: #{tpu_custom_call.1} parent=1 // pred_region
      %48 = dma.done [#allocation7], 256
    $region25: #{tpu_custom_call.1} parent=1 // pred_fallthru
      _
    %s50 = sld [smem:[#allocation2]]
    %v51 = vld [vmem:[#allocation3] sm:$0xff]
    %vm52 = vcmp.gt.f32.partialorder %v51, 0.0
    %v53 = vstv %s50
    %v54 = vmul.f32 %v53, %v51
    %v55 = vsel %vm52, %v51, %v54
    %v56 = vpack.c.bf16 %v55, %v55
    %v57 = vld [vmem:[#allocation6] sm:$0xf]
    %v58 = vld [vmem:[#allocation6 + $0x4] sm:$0xf]
    %v59 = vld [vmem:[#allocation6 + $0x8] sm:$0xf]
    %v60 = vld [vmem:[#allocation6 + $0xc] sm:$0xf]
    %v61 = vld [vmem:[%s3] sm:$0x1]
    %v63 = vperm.slane %v61, 0
    %v69 = vunpack.c.l.b16 %v57
    %v70 = vunpack.c.l.b16 %v58
    %v71 = vunpack.c.l.b16 %v59
    %v72 = vunpack.c.l.b16 %v60
    %v73 = vpack.c.b16 %v70, %v69
    %v74 = vpack.c.b16 %v72, %v71
    %vm77 = vcmask 261120
    %v79 = vsel %vm77, %v56, 0
    %81 = vmatpush.bf16.msra.mxu0 0
    %82 = vmatpush.bf16.msra.mxu0 0
    %83 = vmatpush.bf16.msra.mxu0 0
    %84 = vmatpush.bf16.msra.mxu0 0
    %85 = vmatpush.bf16.msra.mxu0 0
    %86 = vmatpush.bf16.msra.mxu0 0
    %87 = vmatpush.bf16.msra.mxu0 %v74
    %88 = vmatpush.bf16.msra.mxu0 %v73
    %89 = vmatmul.bf16.gmra.mxu0 %v79
    %v90 = vpop.f32.mrf.mxu0
    %v91 = vadd.f32 %v63, %v90
    %v92 = vpop.f32.mrf.mxu0
    %93 = vdwg.mxu0
    %94 = vmax.xlane.f32.xlu0 %v91
    %v95 = vpop.xlane.xlu0 %94
    %v96 = vsub.f32 %v91, %v95
    %v97 = vmul.f32 %v96, 1.442695
    %v98 = vpow.pop %v97
    %99 = vadd.xlane.f32.xlu0 %v98
    %v100 = vpop.xlane.xlu0 %99
    %v101 = vlog2.pop %v100
    %v102 = vmul.f32 %v101, 0.6931472
    %v103 = vsub.f32 %v96, %v102
    %104 = vst [vmem:[#allocation8] sm:$0xff] %v103
    // Predicated region
    $region26: #{tpu_custom_call.1} parent=1 // pred_check
      _
    $region27: #{tpu_custom_call.1} parent=1 // pred_check_branch
      %106 = sbr.rel (0) target = $region29
    $region28: #{tpu_custom_call.1} parent=1 // pred_region
      %108 = vsyncadd [#allocation5], 0
      %s110 = sshll.u32 [#allocation8], 4
      %s111 = int_to_ptr.vmem [resolvable:$true] %s110
      %s112 = sshll.u32 %s4, 4
      %s113 = int_to_ptr.hbm [resolvable:$true] %s112
      %115 = dma.vmem_to_hbm [thread:$0]  %s111, 128, %s113, [#allocation5]
    $region29: #{tpu_custom_call.1} parent=1 // pred_fallthru
      _
    // Predicated region
    $region30: #{tpu_custom_call.1} parent=1 // pred_check
      _
    $region31: #{tpu_custom_call.1} parent=1 // pred_check_branch
      %117 = sbr.rel (0) target = $region33
    $region32: #{tpu_custom_call.1} parent=1 // pred_region
      %119 = dma.done [#allocation5], 128
    $region33: #{tpu_custom_call.1} parent=1 // pred_fallthru
      _
    %120 = vsyncpa [#allocation4], 1
    %121 = vsyncpa [#allocation7], 1
    %122 = vsyncpa [#allocation5], 1

</llo_original>
